<compile_context>
chip_gen: v7x
topology: tpu7x:2x2x1
jax: 0.10.0
libtpu: 0.0.40
codegen_flags: <defaults>
</compile_context>

<pallas_src>
import jax
import jax.numpy as jnp
from jax.experimental import pallas as pl
from jax.experimental.pallas import tpu as pltpu

# ----------------------------- configuration (small SAM-like prompt encoder) --
EMBED_DIM = 32
MASK_IN_CHANS = 16
IMAGE_EMBEDDING_SIZE = (8, 8)                       # (He, We)
INPUT_IMAGE_SIZE = (128, 128)                       # (H, W) coordinate space
MASK_INPUT_SIZE = (4 * IMAGE_EMBEDDING_SIZE[0], 4 * IMAGE_EMBEDDING_SIZE[1])

_INV_SQRT2 = 0.7071067811865476
_TWO_PI = 6.283185307179586


def _gelu_exact(x):
    # PyTorch nn.GELU default (erf-based)
    return 0.5 * x * (1.0 + jax.lax.erf(x * _INV_SQRT2))


# ----------------------------------------------------------------- kernels ---
def _sparse_pe_kernel(coords_ref, labels_ref, gauss2_ref, emb_ref, o_ref):
    # coords_ref: (P, 2) in [0, 1]; labels_ref: (P, 1) int32
    # gauss2_ref: (2, D) gaussian with duplicated columns; emb_ref: (5, D)
    c = 2.0 * coords_ref[...] - 1.0                                    # (P, 2)
    g = gauss2_ref[...]                                                # (2, D)
    # K=2 contraction as broadcast FMAs on the VPU (skip the MXU round trip).
    pe_arg = _TWO_PI * (c[:, 0:1] * g[0:1, :] + c[:, 1:2] * g[1:2, :])  # (P, D)
    d_half = g.shape[1] // 2
    lane = jax.lax.broadcasted_iota(jnp.int32, pe_arg.shape, 1)
    pe_full = jnp.where(lane < d_half, jnp.sin(pe_arg), jnp.cos(pe_arg))

    lbl = labels_ref[...]                                              # (P, 1)
    # label values -1,0,1,2,3 -> emb rows 0..4 via one-hot matmul.
    lbl_vals = jax.lax.broadcasted_iota(jnp.int32, (1, 5), 1) - 1      # [[-1,0,1,2,3]]
    onehot = (lbl == lbl_vals).astype(jnp.float32)                     # (P, 5)
    emb_add = jnp.dot(onehot, emb_ref[...],
                      preferred_element_type=jnp.float32)              # (P, D)
    valid = (lbl != -1).astype(jnp.float32)                            # zero PE for not-a-point
    o_ref[...] = pe_full * valid + emb_add


def _dense_pe_kernel(coords_t_ref, gauss_t_ref, o_ref):
    # coords_t_ref: (2, HW) normalized grid coords; gauss_t_ref: (D, 2)
    # (rows d and d+D/2 both hold gaussian column d).  Output (D, HW): rows
    # 0..D/2-1 = sin features, D/2..D-1 = cos features (channel-first).
    c = 2.0 * coords_t_ref[...] - 1.0                                  # (2, HW)
    g = gauss_t_ref[...]                                               # (D, 2)
    pe_arg = _TWO_PI * (g[:, 0:1] * c[0:1, :] + g[:, 1:2] * c[1:2, :])  # (D, HW)
    d_half = g.shape[0] // 2
    row = jax.lax.broadcasted_iota(jnp.int32, pe_arg.shape, 0)
    o_ref[...] = jnp.where(row < d_half, jnp.sin(pe_arg), jnp.cos(pe_arg))


def _mask_downscale_kernel(x_ref, w1t_ref, pmat_ref, b1_ref, g1_ref, be1_ref,
                           w2t_ref, b2_ref, g2_ref, be2_ref,
                           w3t_ref, b3_ref, o_ref):
    # Fully fused mask_downscaling for ONE image, (channels, pixels) layout.
    #   x_ref : (16, 64)  -- 4x4 space-to-depth of the 32x32 mask
    #                        rows = (di, dj) in the 4x4 patch, cols = 8x8 pixel
    #   w1t   : (16, 16)  -- stage-1 conv folded over its 2x2 sub-positions
    #   pmat  : (16, 16)  -- block-diagonal 1/c1 matrix (grouped channel mean)
    #   w2t   : (16, 16), w3t: (D, 16); biases / LN params are (rows, 1)
    x = x_ref[...]                                                     # (16, 64)

    # ---- stage 1: conv 1->c1, k2 s2 (all 2x2 sub-positions at once) + LN + GELU
    y = jnp.dot(w1t_ref[...], x, preferred_element_type=jnp.float32) + b1_ref[...]
    pmat = pmat_ref[...]
    mu = jnp.dot(pmat, y, preferred_element_type=jnp.float32)          # grouped mean
    var = jnp.dot(pmat, (y - mu) ** 2, preferred_element_type=jnp.float32)
    yn = (y - mu) * jax.lax.rsqrt(var + 1e-6)                          # LayerNorm2d eps=1e-6
    g1 = _gelu_exact(yn * g1_ref[...] + be1_ref[...])                  # (16, 64)

    # ---- stage 2: conv c1->16, k2 s2 + LN + GELU (rows already in im2col order)
    z = jnp.dot(w2t_ref[...], g1, preferred_element_type=jnp.float32) + b2_ref[...]
    mu2 = jnp.mean(z, axis=0, keepdims=True)
    var2 = jnp.mean((z - mu2) ** 2, axis=0, keepdims=True)
    zn = (z - mu2) * jax.lax.rsqrt(var2 + 1e-6)
    g2 = _gelu_exact(zn * g2_ref[...] + be2_ref[...])                  # (16, 64)

    # ---- stage 3: 1x1 conv 16 -> D (output already in NCHW-flattened order)
    o_ref[...] = (jnp.dot(w3t_ref[...], g2,
                          preferred_element_type=jnp.float32) + b3_ref[...])


# ------------------------------------------------------------ pallas wrappers -
def sparse_pe(coords_norm, labels, gauss2, emb_table):
    P = coords_norm.shape[0]
    D = emb_table.shape[1]
    return pl.pallas_call(
        _sparse_pe_kernel,
        out_shape=jax.ShapeDtypeStruct((P, D), jnp.float32),
        grid=(1,),
        in_specs=[
            pl.BlockSpec((P, 2), lambda i: (0, 0)),
            pl.BlockSpec((P, 1), lambda i: (0, 0)),
            pl.BlockSpec(gauss2.shape, lambda i: (0, 0)),
            pl.BlockSpec(emb_table.shape, lambda i: (0, 0)),
        ],
        out_specs=pl.BlockSpec((P, D), lambda i: (0, 0)),
    )(coords_norm, labels, gauss2, emb_table)


def dense_pe(coords_t, gauss_t):
    D = gauss_t.shape[0]
    HW = coords_t.shape[1]
    return pl.pallas_call(
        _dense_pe_kernel,
        out_shape=jax.ShapeDtypeStruct((D, HW), jnp.float32),
        grid=(1,),
        in_specs=[
            pl.BlockSpec((2, HW), lambda i: (0, 0)),
            pl.BlockSpec((D, 2), lambda i: (0, 0)),
        ],
        out_specs=pl.BlockSpec((D, HW), lambda i: (0, 0)),
    )(coords_t, gauss_t)


def mask_downscale(x, w1t, pmat, b1v, g1v, be1v, w2t, b2v, g2v, be2v, w3t, b3v):
    # x: (B, 16, 64); output (B, D, 64).  Grid over batch ("parallel" -> v7x 2 TCs).
    B, R, HW = x.shape
    D = w3t.shape[0]

    def _full(a):
        return pl.BlockSpec(a.shape, lambda b, _nd=a.ndim: (0,) * _nd)

    return pl.pallas_call(
        _mask_downscale_kernel,
        out_shape=jax.ShapeDtypeStruct((B, D, HW), jnp.float32),
        grid=(B,),
        in_specs=[
            pl.BlockSpec((None, R, HW), lambda b: (b, 0, 0)),
            _full(w1t), _full(pmat), _full(b1v), _full(g1v), _full(be1v),
            _full(w2t), _full(b2v), _full(g2v), _full(be2v),
            _full(w3t), _full(b3v),
        ],
        out_specs=pl.BlockSpec((None, D, HW), lambda b: (b, 0, 0)),
        compiler_params=pltpu.CompilerParams(dimension_semantics=("parallel",)),
    )(x, w1t, pmat, b1v, g1v, be1v, w2t, b2v, g2v, be2v, w3t, b3v)


# ------------------------------------------------------------------- helpers --
def _space_to_depth4(masks):
    """NCHW masks (B,1,H,W) -> (B, 16, (H//4)*(W//4)); rows ordered (di,dj) within
    each non-overlapping 4x4 patch, columns ordered row-major over output pixels."""
    B, _, H, W = masks.shape
    m = masks[:, 0].astype(jnp.float32)                          # (B, H, W)
    m = m.reshape(B, H // 4, 4, W // 4, 4)                       # (B, ii, di, jj, dj)
    m = m.transpose(0, 2, 4, 1, 3)                               # (B, di, dj, ii, jj)
    return m.reshape(B, 16, (H // 4) * (W // 4))


def _conv_w_to_matmul(w):
    """PyTorch conv weight (Cout, Cin, kh, kw) -> (kh*kw*Cin, Cout) im2col order."""
    cout, cin, kh, kw = w.shape
    return w.transpose(2, 3, 1, 0).reshape(kh * kw * cin, cout)


# ------------------------------------------------------------- module (JAX) ---
class PromptEncoderWrapperPallas:
    """JAX/Pallas reimplementation of SAM's PromptEncoder forward (fix=True:
    parameters are frozen constants initialized deterministically in-script)."""

    def __init__(self, key):
        D = EMBED_DIM
        c1 = MASK_IN_CHANS // 4
        keys = jax.random.split(key, 12)
        # PositionEmbeddingRandom gaussian matrix, scale = 1.0
        self.pe_gauss = jax.random.normal(keys[0], (2, D // 2), jnp.float32)
        # 4 point embeddings + not_a_point + no_mask (each nn.Embedding(1, D))
        self.point_embeddings = [
            jax.random.normal(keys[1 + i], (1, D), jnp.float32) for i in range(4)
        ]
        self.not_a_point_embed = jax.random.normal(keys[5], (1, D), jnp.float32)
        self.no_mask_embed = jax.random.normal(keys[6], (1, D), jnp.float32)
        # rows: [not_a_point, pe0, pe1, pe2(box TL), pe3(box BR)]
        self.emb_table = jnp.concatenate(
            [self.not_a_point_embed] + self.point_embeddings, axis=0)
        # duplicated-column gaussians for lane/sublane sin|cos select
        self.pe_gauss2 = jnp.concatenate([self.pe_gauss, self.pe_gauss], axis=1)   # (2, D)
        self.pe_gauss_t = jnp.concatenate([self.pe_gauss.T, self.pe_gauss.T], axis=0)  # (D, 2)

        # mask_downscaling: Conv(1->c1,k2,s2) LN GELU Conv(c1->16,k2,s2) LN GELU Conv(16->D,k1)
        self.w1 = 0.1 * jax.random.normal(keys[7], (c1, 1, 2, 2), jnp.float32)
        self.b1 = 0.01 * jax.random.normal(keys[8], (c1,), jnp.float32)
        self.ln1_g = jnp.ones((c1,), jnp.float32)
        self.ln1_b = jnp.zeros((c1,), jnp.float32)
        self.w2 = 0.1 * jax.random.normal(keys[9], (MASK_IN_CHANS, c1, 2, 2), jnp.float32)
        self.b2 = 0.01 * jax.random.normal(keys[10], (MASK_IN_CHANS,), jnp.float32)
        self.ln2_g = jnp.ones((MASK_IN_CHANS,), jnp.float32)
        self.ln2_b = jnp.zeros((MASK_IN_CHANS,), jnp.float32)
        self.w3 = 0.1 * jax.random.normal(keys[11], (D, MASK_IN_CHANS, 1, 1), jnp.float32)
        self.b3 = jnp.zeros((D,), jnp.float32)

        # ---- pre-folded weights for the fused (channels, pixels) dense kernel ----
        # Stage 1: fold the 2x2/s2 conv over the 4 sub-positions of each 4x4 patch.
        # Output row r = b*c1 + cout (b = bh*2+bw is the stage-1 sub-position),
        # input col = di*4 + dj = (2*bh+kh)*4 + (2*bw+kw).
        w1t = jnp.zeros((4 * c1, 16), jnp.float32)
        for bh in range(2):
            for bw in range(2):
                b = bh * 2 + bw
                for kh in range(2):
                    for kw in range(2):
                        col = (2 * bh + kh) * 4 + (2 * bw + kw)
                        w1t = w1t.at[b * c1:(b + 1) * c1, col].set(self.w1[:, 0, kh, kw])
        self.w1t_fold = w1t                                            # (16, 16)
        self.b1_vec = jnp.tile(self.b1, 4).reshape(4 * c1, 1)
        self.g1_vec = jnp.tile(self.ln1_g, 4).reshape(4 * c1, 1)
        self.be1_vec = jnp.tile(self.ln1_b, 4).reshape(4 * c1, 1)
        # grouped-mean matrix: mean over each group of c1 channel rows
        self.pmat = jnp.kron(jnp.eye(4, dtype=jnp.float32),
                             jnp.full((c1, c1), 1.0 / c1, jnp.float32))  # (16, 16)
        # Stage 2: rows of the stage-1 output are already in (kh, kw, cin) im2col order.
        self.w2t = _conv_w_to_matmul(self.w2).T                        # (16, 16)
        self.b2_vec = self.b2.reshape(MASK_IN_CHANS, 1)
        self.g2_vec = self.ln2_g.reshape(MASK_IN_CHANS, 1)
        self.be2_vec = self.ln2_b.reshape(MASK_IN_CHANS, 1)
        # Stage 3: 1x1 conv
        self.w3t = self.w3.reshape(D, MASK_IN_CHANS)                   # (D, 16)
        self.b3_vec = self.b3.reshape(D, 1)

    # ------------------------------------------------------------------ utils
    @staticmethod
    def _get_batch_size(points, boxes, masks):
        if points is not None:
            return points[0].shape[0]
        if boxes is not None:
            return boxes.shape[0]
        if masks is not None:
            return masks.shape[0]
        return 1

    # ----------------------------------------------------------------- dense
    def _embed_masks(self, masks):
        # masks: (B, 1, 4*He, 4*We) NCHW  ->  dense embeddings (B, D, He, We)
        B = masks.shape[0]
        He, We = IMAGE_EMBEDDING_SIZE
        x = _space_to_depth4(masks)                                    # (B, 16, He*We)
        out = mask_downscale(
            x, self.w1t_fold, self.pmat, self.b1_vec, self.g1_vec, self.be1_vec,
            self.w2t, self.b2_vec, self.g2_vec, self.be2_vec,
            self.w3t, self.b3_vec)                                     # (B, D, He*We)
        return out.reshape(B, EMBED_DIM, He, We)                       # free reshape (NCHW)

    # ---------------------------------------------------------------- forward
    def __call__(self, points=None, boxes=None, masks=None):
        D = EMBED_DIM
        bs = self._get_batch_size(points, boxes, masks)
        coords_list, labels_list = [], []

        if points is not None:
            pts, lbls = points
            pts = pts.astype(jnp.float32) + 0.5                        # pixel-center shift
            lbls = lbls.astype(jnp.int32)
            if boxes is None:                                          # pad with not-a-point
                pts = jnp.concatenate(
                    [pts, jnp.zeros((pts.shape[0], 1, 2), jnp.float32)], axis=1)
                lbls = jnp.concatenate(
                    [lbls, -jnp.ones((lbls.shape[0], 1), jnp.int32)], axis=1)
            coords_list.append(pts)
            labels_list.append(lbls)

        if boxes is not None:
            b = boxes.astype(jnp.float32) + 0.5
            corners = b.reshape(-1, 2, 2)                              # (bs, 2, 2)
            corner_lbls = jnp.broadcast_to(
                jnp.array([2, 3], jnp.int32), (corners.shape[0], 2))
            coords_list.append(corners)
            labels_list.append(corner_lbls)

        if coords_list:
            coords = jnp.concatenate(coords_list, axis=1)              # (bs, Ntot, 2)
            labels = jnp.concatenate(labels_list, axis=1)              # (bs, Ntot)
            # normalize: x / W, y / H  (SAM forward_with_coords)
            coords = coords / jnp.array(
                [INPUT_IMAGE_SIZE[1], INPUT_IMAGE_SIZE[0]], jnp.float32)
            ntot = coords.shape[1]
            flat_c = coords.reshape(bs * ntot, 2)
            flat_l = labels.reshape(bs * ntot, 1).astype(jnp.int32)
            sparse = sparse_pe(flat_c, flat_l, self.pe_gauss2, self.emb_table)
            sparse_embeddings = sparse.reshape(bs, ntot, D)
        else:
            sparse_embeddings = jnp.zeros((bs, 0, D), jnp.float32)

        if masks is not None:
            dense_embeddings = self._embed_masks(masks)
        else:
            dense_embeddings = jnp.broadcast_to(
                self.no_mask_embed.reshape(1, D, 1, 1),
                (bs, D, IMAGE_EMBEDDING_SIZE[0], IMAGE_EMBEDDING_SIZE[1]))

        return sparse_embeddings, dense_embeddings

    # ------------------------------------------------------------ dense PE ---
    def get_dense_pe(self):
        H, W = IMAGE_EMBEDDING_SIZE
        ys = (jnp.arange(H, dtype=jnp.float32) + 0.5) / H
        xs = (jnp.arange(W, dtype=jnp.float32) + 0.5) / W
        # (2, H*W): row 0 = x, row 1 = y (row-major over (i, j))
        coords_t = jnp.stack([jnp.tile(xs, H), jnp.repeat(ys, W)], axis=0)
        pe = dense_pe(coords_t, self.pe_gauss_t)                       # (D, H*W), channel-first
        return pe.reshape(1, EMBED_DIM, H, W)                          # free reshape


# ---------------------------------------------------------------------- main --
if __name__ == "__main__":
    key = jax.random.PRNGKey(0)
    kpts, klbl, kmask, kparam = jax.random.split(key, 4)

    encoder = PromptEncoderWrapperPallas(kparam)

    B, NPTS = 2, 3
    points = jax.random.uniform(kpts, (B, NPTS, 2), jnp.float32,
                                0.0, float(INPUT_IMAGE_SIZE[0] - 1))
    labels = jax.random.randint(klbl, (B, NPTS), 0, 2).astype(jnp.int32)
    boxes = jnp.array([[8.0, 8.0, 64.0, 96.0],
                       [4.0, 16.0, 100.0, 80.0]], jnp.float32)         # (B, 4)
    masks = jax.random.normal(
        kmask, (B, 1, MASK_INPUT_SIZE[0], MASK_INPUT_SIZE[1]), jnp.float32)

    sparse_emb, dense_emb = encoder(points=(points, labels), boxes=boxes, masks=masks)
    dense_pe_out = encoder.get_dense_pe()

    jax.block_until_ready((sparse_emb, dense_emb, dense_pe_out))

    assert sparse_emb.shape == (B, NPTS + 2, EMBED_DIM)
    assert dense_emb.shape == (B, EMBED_DIM, *IMAGE_EMBEDDING_SIZE)
    assert dense_pe_out.shape == (1, EMBED_DIM, *IMAGE_EMBEDDING_SIZE)

    print("KERNEL_OK")
</pallas_src>

<mosaic_0001>
module attributes {stable_mosaic.version = 11 : i64} {
  func.func @_sparse_pe_kernel(%arg0: i32, %arg1: memref<10x2xf32, #tpu.memory_space<vmem>>, %arg2: memref<10x1xi32, #tpu.memory_space<vmem>>, %arg3: memref<2x32xf32, #tpu.memory_space<vmem>>, %arg4: memref<5x32xf32, #tpu.memory_space<vmem>>, %arg5: memref<10x32xf32, #tpu.memory_space<vmem>>) attributes {dimension_semantics = [#tpu.dimension_semantics<arbitrary>], iteration_bounds = array<i64: 1>, scalar_prefetch = 0 : i64, scratch_operands = 0 : i64, tpu.core_type = #tpu.core_type<tc>, window_params = [{pipeline_mode = #tpu.pipeline_mode<synchronous>, transform_indices = @transform_0, window_bounds = array<i64: 10, 2>}, {pipeline_mode = #tpu.pipeline_mode<synchronous>, transform_indices = @transform_1, window_bounds = array<i64: 10, 1>}, {pipeline_mode = #tpu.pipeline_mode<synchronous>, transform_indices = @transform_2, window_bounds = array<i64: 2, 32>}, {pipeline_mode = #tpu.pipeline_mode<synchronous>, transform_indices = @transform_3, window_bounds = array<i64: 5, 32>}, {pipeline_mode = #tpu.pipeline_mode<synchronous>, transform_indices = @transform_4, window_bounds = array<i64: 10, 32>}]} {
    %c0 = arith.constant 0 : index
    %c0_0 = arith.constant 0 : index
    %0 = vector.load %arg1[%c0, %c0_0] : memref<10x2xf32, #tpu.memory_space<vmem>>, vector<10x2xf32>
    %cst = arith.constant 2.000000e+00 : f32
    %1 = vector.broadcast %cst : f32 to vector<10x2xf32>
    %2 = arith.mulf %1, %0 : vector<10x2xf32>
    %cst_1 = arith.constant 1.000000e+00 : f32
    %3 = vector.broadcast %cst_1 : f32 to vector<10x2xf32>
    %4 = arith.subf %2, %3 : vector<10x2xf32>
    %c0_2 = arith.constant 0 : index
    %c0_3 = arith.constant 0 : index
    %5 = vector.load %arg3[%c0_2, %c0_3] : memref<2x32xf32, #tpu.memory_space<vmem>>, vector<2x32xf32>
    %6 = vector.extract_strided_slice %4 {offsets = [0, 0], sizes = [10, 1], strides = [1, 1]} : vector<10x2xf32> to vector<10x1xf32>
    %7 = vector.extract_strided_slice %5 {offsets = [0, 0], sizes = [1, 32], strides = [1, 1]} : vector<2x32xf32> to vector<1x32xf32>
    %8 = vector.broadcast %6 : vector<10x1xf32> to vector<10x32xf32>
    %9 = vector.broadcast %7 : vector<1x32xf32> to vector<10x32xf32>
    %10 = arith.mulf %8, %9 : vector<10x32xf32>
    %11 = vector.extract_strided_slice %4 {offsets = [0, 1], sizes = [10, 1], strides = [1, 1]} : vector<10x2xf32> to vector<10x1xf32>
    %12 = vector.extract_strided_slice %5 {offsets = [1, 0], sizes = [1, 32], strides = [1, 1]} : vector<2x32xf32> to vector<1x32xf32>
    %13 = vector.broadcast %11 : vector<10x1xf32> to vector<10x32xf32>
    %14 = vector.broadcast %12 : vector<1x32xf32> to vector<10x32xf32>
    %15 = arith.mulf %13, %14 : vector<10x32xf32>
    %16 = arith.addf %10, %15 : vector<10x32xf32>
    %cst_4 = arith.constant 6.28318548 : f32
    %17 = vector.broadcast %cst_4 : f32 to vector<10x32xf32>
    %18 = arith.mulf %17, %16 : vector<10x32xf32>
    %19 = tpu.iota {dimensions = array<i32: 1>} : vector<10x32xi32>
    %c16_i32 = arith.constant 16 : i32
    %20 = vector.broadcast %c16_i32 : i32 to vector<10x32xi32>
    %21 = arith.cmpi slt, %19, %20 : vector<10x32xi32>
    %22 = math.sin %18 : vector<10x32xf32>
    %23 = math.cos %18 : vector<10x32xf32>
    %24 = arith.select %21, %22, %23 : vector<10x32xi1>, vector<10x32xf32>
    %c0_5 = arith.constant 0 : index
    %c0_6 = arith.constant 0 : index
    %25 = vector.load %arg2[%c0_5, %c0_6] : memref<10x1xi32, #tpu.memory_space<vmem>>, vector<10x1xi32>
    %26 = tpu.iota {dimensions = array<i32: 1>} : vector<1x5xi32>
    %c1_i32 = arith.constant 1 : i32
    %27 = vector.broadcast %c1_i32 : i32 to vector<1x5xi32>
    %28 = arith.subi %26, %27 : vector<1x5xi32>
    %29 = vector.broadcast %25 : vector<10x1xi32> to vector<10x5xi32>
    %30 = vector.broadcast %28 : vector<1x5xi32> to vector<10x5xi32>
    %31 = arith.cmpi eq, %29, %30 : vector<10x5xi32>
    %32 = arith.extui %31 : vector<10x5xi1> to vector<10x5xi32>
    %33 = arith.sitofp %32 : vector<10x5xi32> to vector<10x5xf32>
    %c0_7 = arith.constant 0 : index
    %c0_8 = arith.constant 0 : index
    %34 = vector.load %arg4[%c0_7, %c0_8] : memref<5x32xf32, #tpu.memory_space<vmem>>, vector<5x32xf32>
    %cst_9 = arith.constant dense<0.000000e+00> : vector<10x32xf32>
    %35 = tpu.matmul %33, %34, %cst_9 {dimension_numbers = #tpu.dot_dimension_numbers<[1], [0], [0], [1], [0, 0, 1, 1], [], []>} : vector<10x5xf32>, vector<5x32xf32>, vector<10x32xf32> -> vector<10x32xf32>
    %c-1_i32 = arith.constant -1 : i32
    %36 = vector.broadcast %c-1_i32 : i32 to vector<10x1xi32>
    %37 = arith.cmpi ne, %25, %36 : vector<10x1xi32>
    %38 = arith.extui %37 : vector<10x1xi1> to vector<10x1xi32>
    %39 = arith.sitofp %38 : vector<10x1xi32> to vector<10x1xf32>
    %40 = vector.broadcast %39 : vector<10x1xf32> to vector<10x32xf32>
    %41 = arith.mulf %24, %40 : vector<10x32xf32>
    %42 = arith.addf %41, %35 : vector<10x32xf32>
    %c0_10 = arith.constant 0 : index
    %c0_11 = arith.constant 0 : index
    %43 = vector.load %arg5[%c0_10, %c0_11] : memref<10x32xf32, #tpu.memory_space<vmem>>, vector<10x32xf32>
    tpu.vector_store %arg5[%c0_10, %c0_11], %42 {strides = array<i32>} : memref<10x32xf32, #tpu.memory_space<vmem>>, vector<10x32xf32>,
    return
  }
  func.func @transform_0(%arg0: i32) -> (i32, i32) {
    %c0_i32 = arith.constant 0 : i32
    %c0_i32_0 = arith.constant 0 : i32
    %c0_i32_1 = arith.constant 0 : i32
    return %c0_i32, %c0_i32_0 : i32, i32
  }
  func.func @transform_1(%arg0: i32) -> (i32, i32) {
    %c0_i32 = arith.constant 0 : i32
    %c0_i32_0 = arith.constant 0 : i32
    %c0_i32_1 = arith.constant 0 : i32
    return %c0_i32, %c0_i32_0 : i32, i32
  }
  func.func @transform_2(%arg0: i32) -> (i32, i32) {
    %c0_i32 = arith.constant 0 : i32
    %c0_i32_0 = arith.constant 0 : i32
    %c0_i32_1 = arith.constant 0 : i32
    return %c0_i32, %c0_i32_0 : i32, i32
  }
  func.func @transform_3(%arg0: i32) -> (i32, i32) {
    %c0_i32 = arith.constant 0 : i32
    %c0_i32_0 = arith.constant 0 : i32
    %c0_i32_1 = arith.constant 0 : i32
    return %c0_i32, %c0_i32_0 : i32, i32
  }
  func.func @transform_4(%arg0: i32) -> (i32, i32) {
    %c0_i32 = arith.constant 0 : i32
    %c0_i32_0 = arith.constant 0 : i32
    %c0_i32_1 = arith.constant 0 : i32
    return %c0_i32, %c0_i32_0 : i32, i32
  }
}

</mosaic_0001>

<llo_original>
// kernel: tpu_custom_call.1
$region0: #{tpu_custom_call.1}
  #allocation0 [shape = 'u32[]', space=smem, size = 0x4, offset = 0x4, fixed_abs, tag = 'smem constant byte address 0x4 - core index']
  #allocation1 [shape = 'u32[144,128]{1,0:T(1,128)}', space=vmem, size = 0x12000, scoped, tag = 'internal scratch']
  %s0 = inlined_call_operand.vmem [shape: f32[10,2], index: 0, kind: input, shape index: {}]
  %s1 = inlined_call_operand.vmem [shape: s32[10,1], index: 1, kind: input, shape index: {}]
  %s2 = inlined_call_operand.vmem [shape: f32[2,32], index: 2, kind: input, shape index: {}]
  %s3 = inlined_call_operand.vmem [shape: f32[5,32], index: 3, kind: input, shape index: {}]
  %s4 = inlined_call_operand.hbm [shape: f32[10,32], index: 4, kind: output, shape index: {}]
  %s5 = sld [smem:[#allocation0]]
  $region26: #{tpu_custom_call.1} parent=0
    _
  %s7 = ssub.s32 1, %s5
  %s8 = scalar_select 0, %s7, %s5
  $region1: #{tpu_custom_call.1} parent=0
    #allocation2 [shape = 'u8[8192]{0}', space=vmem, size = 0x2000, scoped, tag = 'output window, operand 0, single buffered']
    #allocation3 [shape = 's32[1]{0}', space=sflag, size = 0x4, scoped, tag = 'scoped memory for tpu_custom_call.1']
    %9 = vsyncpa [#allocation3], 0
    // Predicated region
    $region2: #{tpu_custom_call.1} parent=1 // pred_check
      _
    $region3: #{tpu_custom_call.1} parent=1 // pred_check_branch
      %11 = sbr.rel (0) target = $region5
    $region4: #{tpu_custom_call.1} parent=1 // pred_region
      _
    $region5: #{tpu_custom_call.1} parent=1 // pred_fallthru
      _
    // Predicated region
    $region6: #{tpu_custom_call.1} parent=1 // pred_check
      _
    $region7: #{tpu_custom_call.1} parent=1 // pred_check_branch
      %13 = sbr.rel (0) target = $region9
    $region8: #{tpu_custom_call.1} parent=1 // pred_region
      _
    $region9: #{tpu_custom_call.1} parent=1 // pred_fallthru
      _
    // Predicated region
    $region10: #{tpu_custom_call.1} parent=1 // pred_check
      _
    $region11: #{tpu_custom_call.1} parent=1 // pred_check_branch
      %15 = sbr.rel (0) target = $region13
    $region12: #{tpu_custom_call.1} parent=1 // pred_region
      _
    $region13: #{tpu_custom_call.1} parent=1 // pred_fallthru
      _
    // Predicated region
    $region14: #{tpu_custom_call.1} parent=1 // pred_check
      _
    $region15: #{tpu_custom_call.1} parent=1 // pred_check_branch
      %17 = sbr.rel (0) target = $region17
    $region16: #{tpu_custom_call.1} parent=1 // pred_region
      _
    $region17: #{tpu_custom_call.1} parent=1 // pred_fallthru
      _
    %v18 = vld [vmem:[%s0] sm:$0xff]
    %v19 = vld [vmem:[%s0 + $0x8] sm:$0x3]
    %v20 = vmul.f32 %v18, 2.0
    %v21 = vmul.f32 %v19, 2.0
    %v22 = vsub.f32 %v20, 1.0
    %v23 = vsub.f32 %v21, 1.0
    %v24 = vld [vmem:[%s2] sm:$0x3]
    %26 = vset.pattern.permute.xlu0 0
    %27 = vperm.xlu0 %26, %v22
    %v28 = vpop.permute.xlu0 %27
    %31 = vset.pattern.permute.xlu0 0
    %32 = vperm.xlu0 %31, %v23
    %v33 = vpop.permute.xlu0 %32
    %v35 = vlaneseq
    %v36 = vshrl.u32 %v35, 7
    %v37 = vsub.s32 0, %v36
    %v38 = vrot.slane %v24, %v37
    %v39 = vmul.f32 %v28, %v38
    %v40 = vmul.f32 %v33, %v38
    %41 = vset.pattern.permute.xlu0 1
    %42 = vperm.xlu0 %41, %v22
    %v43 = vpop.permute.xlu0 %42
    %45 = vset.pattern.permute.xlu0 1
    %46 = vperm.xlu0 %45, %v23
    %v47 = vpop.permute.xlu0 %46
    %v49 = vlaneseq
    %v50 = vshrl.u32 %v49, 7
    %v51 = vsub.s32 1, %v50
    %v52 = vrot.slane %v24, %v51
    %v53 = vmul.f32 %v43, %v52
    %v54 = vmul.f32 %v47, %v52
    %v55 = vadd.f32 %v39, %v53
    %v56 = vadd.f32 %v40, %v54
    %v57 = vmul.f32 %v55, 6.2831855
    %v58 = vmul.f32 %v56, 6.2831855
    %v59 = vlaneseq
    %v60 = vand.u32 %v59, 127
    %vm61 = vcmp.lt.s32.totalorder %v60, 16
    %v62 = vand.u32 2147483647, %v57
    %vm63 = vcmp.le.f32.partialorder %v62, 0.7853982
    %vm64 = vcmp.lt.s32.totalorder %v57, 0
    %v65 = vand.u32 %v57, 2139095040
    %v66 = vshrl.u32 %v65, 23
    %v67 = vsub.s32 %v66, 127
    %v68 = vand.u32 2147483647, %v57
    %v69 = vand.u32 %v68, 8388607
    %v70 = vor.u32 %v69, 8388608
    %v71 = vsub.s32 0, %v70
    %v72 = vadd.s32 %v67, 1
    %vm73 = vcmp.gt.s32.totalorder %v72, 0
    %v74 = vsel %vm73, %v72, 0
    %v75 = vshrl.u32 %v74, 5
    %v76 = vand.u32 %v74, 31
    %v77 = vsub.s32 32, %v76
    %v78 = vshrl.u32 683565275, %v77
    %v79 = vshll.u32 683565275, %v76
    %v80 = vshrl.u32 2475754826, %v77
    %v81 = vor.u32 %v79, %v80
    %v82 = vshll.u32 2475754826, %v76
    %v83 = vshrl.u32 2131351028, %v77
    %v84 = vor.u32 %v82, %v83
    %v85 = vshll.u32 2131351028, %v76
    %v86 = vshrl.u32 2102212464, %v77
    %v87 = vor.u32 %v85, %v86
    %v88 = vshll.u32 2102212464, %v76
    %v89 = vshrl.u32 920167782, %v77
    %v90 = vor.u32 %v88, %v89
    %v91 = vshll.u32 920167782, %v76
    %v92 = vshrl.u32 1326507024, %v77
    %v93 = vor.u32 %v91, %v92
    %vm94 = vcmp.lt.s32.totalorder %v75, 1
    %vm95 = vcmp.lt.s32.totalorder %v75, 2
    %vm96 = vcmp.lt.s32.totalorder %v75, 3
    %vm97 = vcmp.lt.s32.totalorder %v75, 4
    %v98 = vsel %vm94, %v78, %v81
    %v99 = vsel %vm97, %v87, 2102212464
    %v100 = vsel %vm96, %v84, %v99
    %v101 = vsel %vm95, %v98, %v100
    %v102 = vsel %vm94, %v81, %v84
    %v103 = vsel %vm97, %v90, 920167782
    %v104 = vsel %vm96, %v87, %v103
    %v105 = vsel %vm95, %v102, %v104
    %v106 = vsel %vm94, %v84, %v87
    %v107 = vsel %vm97, %v93, 1326507024
    %v108 = vsel %vm96, %v90, %v107
    %v109 = vsel %vm95, %v106, %v108
    %v110 = vshll.u32 %v70, 8
    %v111 = vmul.u32.u64.compose %v110, %v109
    %v112 = vextract.low.u32 %v111
    %v113 = vextract.high.u32 %v111
    %v114 = vmul.u32.u64.compose %v110, %v105
    %v115 = vextract.low.u32 %v114
    %v116 = vextract.high.u32 %v114
    %v117 = vmul.u32 %v110, %v101
    %v118 = vadd.s32 %v113, %v115
    %vm119 = vc.u32 %v113, %v115
    %v120 = vadd.s32 %v116, 1
    %v121 = vsel %vm119, %v120, %v116
    %v122 = vadd.s32 %v117, %v121
    %v123 = vadd.s32 %v122, 536870912
    %v124 = vshrl.u32 %v123, 30
    %v125 = vshll.u32 %v124, 30
    %v126 = vsub.s32 %v122, %v125
    %vm127 = vcmp.lt.s32.totalorder %v126, 0
    %v128 = vsub.s32 0, %v126
    %v129 = vsel %vm127, %v128, %v126
    %v130 = vclz %v129
    %v131 = vsub.s32 %v130, 2
    %vm132 = vcmp.gt.s32.totalorder 0, %v131
    %v133 = vsel %vm132, 0, %v131
    %v134 = vsub.s32 32, %v133
    %v135 = vshll.u32 %v126, %v133
    %v136 = vshrl.u32 %v118, %v134
    %v137 = vor.u32 %v135, %v136
    %v138 = vsub.s32 4294967266, %v133
    %v139 = vadd.s32 %v138, 127
    %v140 = vshll.u32 %v139, 23
    %v141 = vor.u32 4788187, %v140
    %v142 = vand.u32 2147483647, %v141
    %v144 = vcvt.s32.f32 %v137
    %v145 = vmul.f32 %v144, %v142
    %v146 = vxor.u32 %v145, 2147483648
    %v147 = vsel %vm64, %v146, %v145
    %v148 = vsub.s32 4, %v124
    %v149 = vsel %vm64, %v148, %v124
    %v150 = vsel %vm63, %v57, %v147
    %v151 = vsel %vm63, 0, %v149
    %v152 = vcosq.f32.pop %v150
    %v153 = vsinq.f32.pop %v150
    %vm154 = vweird.f32 %v57
    %v155 = vadd.s32 %v151, 3
    %v156 = vand.u32 %v155, 3
    %vm157 = vcmp.lt.s32.totalorder %v156, 2
    %vm158 = vcmp.eq.s32.totalorder %v156, 0
    %v159 = vxor.u32 %v153, 2147483648
    %v160 = vsel %vm158, %v152, %v159
    %vm161 = vcmp.eq.s32.totalorder %v156, 2
    %v162 = vxor.u32 %v152, 2147483648
    %v163 = vsel %vm161, %v162, %v153
    %v164 = vsel %vm157, %v160, %v163
    %v165 = vsel %vm154, nan, %v164
    %v166 = vand.u32 2147483647, %v58
    %vm167 = vcmp.le.f32.partialorder %v166, 0.7853982
    %vm168 = vcmp.lt.s32.totalorder %v58, 0
    %v169 = vand.u32 %v58, 2139095040
    %v170 = vshrl.u32 %v169, 23
    %v171 = vsub.s32 %v170, 127
    %v172 = vand.u32 2147483647, %v58
    %v173 = vand.u32 %v172, 8388607
    %v174 = vor.u32 %v173, 8388608
    %v175 = vsub.s32 0, %v174
    %v176 = vadd.s32 %v171, 1
    %vm177 = vcmp.gt.s32.totalorder %v176, 0
    %v178 = vsel %vm177, %v176, 0
    %v179 = vshrl.u32 %v178, 5
    %v180 = vand.u32 %v178, 31
    %v181 = vsub.s32 32, %v180
    %v182 = vshrl.u32 683565275, %v181
    %v183 = vshll.u32 683565275, %v180
    %v184 = vshrl.u32 2475754826, %v181
    %v185 = vor.u32 %v183, %v184
    %v186 = vshll.u32 2475754826, %v180
    %v187 = vshrl.u32 2131351028, %v181
    %v188 = vor.u32 %v186, %v187
    %v189 = vshll.u32 2131351028, %v180
    %v190 = vshrl.u32 2102212464, %v181
    %v191 = vor.u32 %v189, %v190
    %v192 = vshll.u32 2102212464, %v180
    %v193 = vshrl.u32 920167782, %v181
    %v194 = vor.u32 %v192, %v193
    %v195 = vshll.u32 920167782, %v180
    %v196 = vshrl.u32 1326507024, %v181
    %v197 = vor.u32 %v195, %v196
    %vm198 = vcmp.lt.s32.totalorder %v179, 1
    %vm199 = vcmp.lt.s32.totalorder %v179, 2
    %vm200 = vcmp.lt.s32.totalorder %v179, 3
    %vm201 = vcmp.lt.s32.totalorder %v179, 4
    %v202 = vsel %vm198, %v182, %v185
    %v203 = vsel %vm201, %v191, 2102212464
    %v204 = vsel %vm200, %v188, %v203
    %v205 = vsel %vm199, %v202, %v204
    %v206 = vsel %vm198, %v185, %v188
    %v207 = vsel %vm201, %v194, 920167782
    %v208 = vsel %vm200, %v191, %v207
    %v209 = vsel %vm199, %v206, %v208
    %v210 = vsel %vm198, %v188, %v191
    %v211 = vsel %vm201, %v197, 1326507024
    %v212 = vsel %vm200, %v194, %v211
    %v213 = vsel %vm199, %v210, %v212
    %v214 = vshll.u32 %v174, 8
    %v215 = vmul.u32.u64.compose %v214, %v213
    %v216 = vextract.low.u32 %v215
    %v217 = vextract.high.u32 %v215
    %v218 = vmul.u32.u64.compose %v214, %v209
    %v219 = vextract.low.u32 %v218
    %v220 = vextract.high.u32 %v218
    %v221 = vmul.u32 %v214, %v205
    %v222 = vadd.s32 %v217, %v219
    %vm223 = vc.u32 %v217, %v219
    %v224 = vadd.s32 %v220, 1
    %v225 = vsel %vm223, %v224, %v220
    %v226 = vadd.s32 %v221, %v225
    %v227 = vadd.s32 %v226, 536870912
    %v228 = vshrl.u32 %v227, 30
    %v229 = vshll.u32 %v228, 30
    %v230 = vsub.s32 %v226, %v229
    %vm231 = vcmp.lt.s32.totalorder %v230, 0
    %v232 = vsub.s32 0, %v230
    %v233 = vsel %vm231, %v232, %v230
    %v234 = vclz %v233
    %v235 = vsub.s32 %v234, 2
    %vm236 = vcmp.gt.s32.totalorder 0, %v235
    %v237 = vsel %vm236, 0, %v235
    %v238 = vsub.s32 32, %v237
    %v239 = vshll.u32 %v230, %v237
    %v240 = vshrl.u32 %v222, %v238
    %v241 = vor.u32 %v239, %v240
    %v242 = vsub.s32 4294967266, %v237
    %v243 = vadd.s32 %v242, 127
    %v244 = vshll.u32 %v243, 23
    %v245 = vor.u32 4788187, %v244
    %v246 = vand.u32 2147483647, %v245
    %v248 = vcvt.s32.f32 %v241
    %v249 = vmul.f32 %v248, %v246
    %v250 = vxor.u32 %v249, 2147483648
    %v251 = vsel %vm168, %v250, %v249
    %v252 = vsub.s32 4, %v228
    %v253 = vsel %vm168, %v252, %v228
    %v254 = vsel %vm167, %v58, %v251
    %v255 = vsel %vm167, 0, %v253
    %v256 = vcosq.f32.pop %v254
    %v257 = vsinq.f32.pop %v254
    %vm258 = vweird.f32 %v58
    %v259 = vadd.s32 %v255, 3
    %v260 = vand.u32 %v259, 3
    %vm261 = vcmp.lt.s32.totalorder %v260, 2
    %vm262 = vcmp.eq.s32.totalorder %v260, 0
    %v263 = vxor.u32 %v257, 2147483648
    %v264 = vsel %vm262, %v256, %v263
    %vm265 = vcmp.eq.s32.totalorder %v260, 2
    %v266 = vxor.u32 %v256, 2147483648
    %v267 = vsel %vm265, %v266, %v257
    %v268 = vsel %vm261, %v264, %v267
    %v269 = vsel %vm258, nan, %v268
    %v270 = vand.u32 2147483647, %v57
    %vm271 = vcmp.le.f32.partialorder %v270, 0.7853982
    %vm272 = vcmp.lt.s32.totalorder %v57, 0
    %v273 = vand.u32 %v57, 2139095040
    %v274 = vshrl.u32 %v273, 23
    %v275 = vsub.s32 %v274, 127
    %v276 = vand.u32 2147483647, %v57
    %v277 = vand.u32 %v276, 8388607
    %v278 = vor.u32 %v277, 8388608
    %v279 = vsub.s32 0, %v278
    %v280 = vadd.s32 %v275, 1
    %vm281 = vcmp.gt.s32.totalorder %v280, 0
    %v282 = vsel %vm281, %v280, 0
    %v283 = vshrl.u32 %v282, 5
    %v284 = vand.u32 %v282, 31
    %v285 = vsub.s32 32, %v284
    %v286 = vshrl.u32 683565275, %v285
    %v287 = vshll.u32 683565275, %v284
    %v288 = vshrl.u32 2475754826, %v285
    %v289 = vor.u32 %v287, %v288
    %v290 = vshll.u32 2475754826, %v284
    %v291 = vshrl.u32 2131351028, %v285
    %v292 = vor.u32 %v290, %v291
    %v293 = vshll.u32 2131351028, %v284
    %v294 = vshrl.u32 2102212464, %v285
    %v295 = vor.u32 %v293, %v294
    %v296 = vshll.u32 2102212464, %v284
    %v297 = vshrl.u32 920167782, %v285
    %v298 = vor.u32 %v296, %v297
    %v299 = vshll.u32 920167782, %v284
    %v300 = vshrl.u32 1326507024, %v285
    %v301 = vor.u32 %v299, %v300
    %vm302 = vcmp.lt.s32.totalorder %v283, 1
    %vm303 = vcmp.lt.s32.totalorder %v283, 2
    %vm304 = vcmp.lt.s32.totalorder %v283, 3
    %vm305 = vcmp.lt.s32.totalorder %v283, 4
    %v306 = vsel %vm302, %v286, %v289
    %v307 = vsel %vm305, %v295, 2102212464
    %v308 = vsel %vm304, %v292, %v307
    %v309 = vsel %vm303, %v306, %v308
    %v310 = vsel %vm302, %v289, %v292
    %v311 = vsel %vm305, %v298, 920167782
    %v312 = vsel %vm304, %v295, %v311
    %v313 = vsel %vm303, %v310, %v312
    %v314 = vsel %vm302, %v292, %v295
    %v315 = vsel %vm305, %v301, 1326507024
    %v316 = vsel %vm304, %v298, %v315
    %v317 = vsel %vm303, %v314, %v316
    %v318 = vshll.u32 %v278, 8
    %v319 = vmul.u32.u64.compose %v318, %v317
    %v320 = vextract.low.u32 %v319
    %v321 = vextract.high.u32 %v319
    %v322 = vmul.u32.u64.compose %v318, %v313
    %v323 = vextract.low.u32 %v322
    %v324 = vextract.high.u32 %v322
    %v325 = vmul.u32 %v318, %v309
    %v326 = vadd.s32 %v321, %v323
    %vm327 = vc.u32 %v321, %v323
    %v328 = vadd.s32 %v324, 1
    %v329 = vsel %vm327, %v328, %v324
    %v330 = vadd.s32 %v325, %v329
    %v331 = vadd.s32 %v330, 536870912
    %v332 = vshrl.u32 %v331, 30
    %v333 = vshll.u32 %v332, 30
    %v334 = vsub.s32 %v330, %v333
    %vm335 = vcmp.lt.s32.totalorder %v334, 0
    %v336 = vsub.s32 0, %v334
    %v337 = vsel %vm335, %v336, %v334
    %v338 = vclz %v337
    %v339 = vsub.s32 %v338, 2
    %vm340 = vcmp.gt.s32.totalorder 0, %v339
    %v341 = vsel %vm340, 0, %v339
    %v342 = vsub.s32 32, %v341
    %v343 = vshll.u32 %v334, %v341
    %v344 = vshrl.u32 %v326, %v342
    %v345 = vor.u32 %v343, %v344
    %v346 = vsub.s32 4294967266, %v341
    %v347 = vadd.s32 %v346, 127
    %v348 = vshll.u32 %v347, 23
    %v349 = vor.u32 4788187, %v348
    %v350 = vand.u32 2147483647, %v349
    %v352 = vcvt.s32.f32 %v345
    %v353 = vmul.f32 %v352, %v350
    %v354 = vxor.u32 %v353, 2147483648
    %v355 = vsel %vm272, %v354, %v353
    %v356 = vsub.s32 4, %v332
    %v357 = vsel %vm272, %v356, %v332
    %v358 = vsel %vm271, %v57, %v355
    %v359 = vsel %vm271, 0, %v357
    %v360 = vcosq.f32.pop %v358
    %v361 = vsinq.f32.pop %v358
    %vm362 = vweird.f32 %v57
    %v363 = vand.u32 %v359, 3
    %vm364 = vcmp.lt.s32.totalorder %v363, 2
    %vm365 = vcmp.eq.s32.totalorder %v363, 0
    %v366 = vxor.u32 %v361, 2147483648
    %v367 = vsel %vm365, %v360, %v366
    %vm368 = vcmp.eq.s32.totalorder %v363, 2
    %v369 = vxor.u32 %v360, 2147483648
    %v370 = vsel %vm368, %v369, %v361
    %v371 = vsel %vm364, %v367, %v370
    %v372 = vsel %vm362, nan, %v371
    %v373 = vand.u32 2147483647, %v58
    %vm374 = vcmp.le.f32.partialorder %v373, 0.7853982
    %vm375 = vcmp.lt.s32.totalorder %v58, 0
    %v376 = vand.u32 %v58, 2139095040
    %v377 = vshrl.u32 %v376, 23
    %v378 = vsub.s32 %v377, 127
    %v379 = vand.u32 2147483647, %v58
    %v380 = vand.u32 %v379, 8388607
    %v381 = vor.u32 %v380, 8388608
    %v382 = vsub.s32 0, %v381
    %v383 = vadd.s32 %v378, 1
    %vm384 = vcmp.gt.s32.totalorder %v383, 0
    %v385 = vsel %vm384, %v383, 0
    %v386 = vshrl.u32 %v385, 5
    %v387 = vand.u32 %v385, 31
    %v388 = vsub.s32 32, %v387
    %v389 = vshrl.u32 683565275, %v388
    %v390 = vshll.u32 683565275, %v387
    %v391 = vshrl.u32 2475754826, %v388
    %v392 = vor.u32 %v390, %v391
    %v393 = vshll.u32 2475754826, %v387
    %v394 = vshrl.u32 2131351028, %v388
    %v395 = vor.u32 %v393, %v394
    %v396 = vshll.u32 2131351028, %v387
    %v397 = vshrl.u32 2102212464, %v388
    %v398 = vor.u32 %v396, %v397
    %v399 = vshll.u32 2102212464, %v387
    %v400 = vshrl.u32 920167782, %v388
    %v401 = vor.u32 %v399, %v400
    %v402 = vshll.u32 920167782, %v387
    %v403 = vshrl.u32 1326507024, %v388
    %v404 = vor.u32 %v402, %v403
    %vm405 = vcmp.lt.s32.totalorder %v386, 1
    %vm406 = vcmp.lt.s32.totalorder %v386, 2
    %vm407 = vcmp.lt.s32.totalorder %v386, 3
    %vm408 = vcmp.lt.s32.totalorder %v386, 4
    %v409 = vsel %vm405, %v389, %v392
    %v410 = vsel %vm408, %v398, 2102212464
    %v411 = vsel %vm407, %v395, %v410
    %v412 = vsel %vm406, %v409, %v411
    %v413 = vsel %vm405, %v392, %v395
    %v414 = vsel %vm408, %v401, 920167782
    %v415 = vsel %vm407, %v398, %v414
    %v416 = vsel %vm406, %v413, %v415
    %v417 = vsel %vm405, %v395, %v398
    %v418 = vsel %vm408, %v404, 1326507024
    %v419 = vsel %vm407, %v401, %v418
    %v420 = vsel %vm406, %v417, %v419
    %v421 = vshll.u32 %v381, 8
    %v422 = vmul.u32.u64.compose %v421, %v420
    %v423 = vextract.low.u32 %v422
    %v424 = vextract.high.u32 %v422
    %v425 = vmul.u32.u64.compose %v421, %v416
    %v426 = vextract.low.u32 %v425
    %v427 = vextract.high.u32 %v425
    %v428 = vmul.u32 %v421, %v412
    %v429 = vadd.s32 %v424, %v426
    %vm430 = vc.u32 %v424, %v426
    %v431 = vadd.s32 %v427, 1
    %v432 = vsel %vm430, %v431, %v427
    %v433 = vadd.s32 %v428, %v432
    %v434 = vadd.s32 %v433, 536870912
    %v435 = vshrl.u32 %v434, 30
    %v436 = vshll.u32 %v435, 30
    %v437 = vsub.s32 %v433, %v436
    %vm438 = vcmp.lt.s32.totalorder %v437, 0
    %v439 = vsub.s32 0, %v437
    %v440 = vsel %vm438, %v439, %v437
    %v441 = vclz %v440
    %v442 = vsub.s32 %v441, 2
    %vm443 = vcmp.gt.s32.totalorder 0, %v442
    %v444 = vsel %vm443, 0, %v442
    %v445 = vsub.s32 32, %v444
    %v446 = vshll.u32 %v437, %v444
    %v447 = vshrl.u32 %v429, %v445
    %v448 = vor.u32 %v446, %v447
    %v449 = vsub.s32 4294967266, %v444
    %v450 = vadd.s32 %v449, 127
    %v451 = vshll.u32 %v450, 23
    %v452 = vor.u32 4788187, %v451
    %v453 = vand.u32 2147483647, %v452
    %v455 = vcvt.s32.f32 %v448
    %v456 = vmul.f32 %v455, %v453
    %v457 = vxor.u32 %v456, 2147483648
    %v458 = vsel %vm375, %v457, %v456
    %v459 = vsub.s32 4, %v435
    %v460 = vsel %vm375, %v459, %v435
    %v461 = vsel %vm374, %v58, %v458
    %v462 = vsel %vm374, 0, %v460
    %v463 = vcosq.f32.pop %v461
    %v464 = vsinq.f32.pop %v461
    %vm465 = vweird.f32 %v58
    %v466 = vand.u32 %v462, 3
    %vm467 = vcmp.lt.s32.totalorder %v466, 2
    %vm468 = vcmp.eq.s32.totalorder %v466, 0
    %v469 = vxor.u32 %v464, 2147483648
    %v470 = vsel %vm468, %v463, %v469
    %vm471 = vcmp.eq.s32.totalorder %v466, 2
    %v472 = vxor.u32 %v463, 2147483648
    %v473 = vsel %vm471, %v472, %v464
    %v474 = vsel %vm467, %v470, %v473
    %v475 = vsel %vm465, nan, %v474
    %v476 = vsel %vm61, %v165, %v372
    %v477 = vsel %vm61, %v269, %v475
    %v478 = vld [vmem:[%s1] sm:$0xff]
    %v479 = vld [vmem:[%s1 + $0x8] sm:$0x3]
    %v480 = vsub.s32 %v60, 1
    %481 = vset.pattern.permute.xlu0 0
    %482 = vperm.xlu0 %481, %v478
    %v483 = vpop.permute.xlu0 %482
    %484 = vset.pattern.permute.xlu0 0
    %485 = vperm.xlu0 %484, %v479
    %v486 = vpop.permute.xlu0 %485
    %vm487 = vcmp.eq.s32.totalorder %v483, %v480
    %vm488 = vcmp.eq.s32.totalorder %v486, %v480
    %v489 = vsel %vm487, 1, 0
    %v490 = vsel %vm488, 1, 0
    %v491 = vcvt.s32.f32 %v489
    %v492 = vcvt.s32.f32 %v490
    %v493 = vld [vmem:[%s3] sm:$0x1f]
    %vm494 = vcmask 39936
    %v496 = vsel %vm494, %v491, 0
    %v499 = vsel %vm494, %v492, 0
    %vm501 = vcmask 1044480
    %v503 = vsel %vm501, %v493, 0
    %505 = vmatprep.subr.mxu0 0.0
    %506 = vmatpush1.msra.mxu0 %v503
    %507 = vmatprep.subr.mxu0 0.0
    %508 = vmatpush1.msra.mxu0 0.0
    %509 = vmatprep.subr.mxu0 0.0
    %510 = vmatpush1.msra.mxu0 0.0
    %511 = vmatprep.subr.mxu0 0.0
    %512 = vmatpush1.msra.mxu0 0.0
    %513 = vmatprep.subr.mxu0 0.0
    %514 = vmatpush1.msra.mxu0 0.0
    %515 = vmatprep.subr.mxu0 0.0
    %516 = vmatpush1.msra.mxu0 0.0
    %517 = vmatprep.subr.mxu0 0.0
    %518 = vmatpush1.msra.mxu0 0.0
    %519 = vmatprep.subr.mxu0 0.0
    %520 = vmatpush1.msra.mxu0 0.0
    %521 = vmatprep.subr.mxu0 0.0
    %522 = vmatpush1.msra.mxu0 0.0
    %523 = vmatprep.subr.mxu0 0.0
    %524 = vmatpush1.msra.mxu0 0.0
    %525 = vmatprep.subr.mxu0 0.0
    %526 = vmatpush1.msra.mxu0 0.0
    %527 = vmatprep.subr.mxu0 0.0
    %528 = vmatpush1.msra.mxu0 0.0
    %529 = vmatprep.subr.mxu0 0.0
    %530 = vmatpush1.msra.mxu0 0.0
    %531 = vmatprep.subr.mxu0 0.0
    %532 = vmatpush1.msra.mxu0 0.0
    %533 = vmatprep.subr.mxu0 0.0
    %534 = vmatpush1.msra.mxu0 0.0
    %535 = vmatprep.subr.mxu0 0.0
    %536 = vmatpush1.msra.mxu0 0.0
    %537 = vmatprep.subr.mxu0 0.0
    %538 = vmatpush1.msra.mxu0 0.0
    %539 = vmatprep.subr.mxu0 0.0
    %540 = vmatpush1.msra.mxu0 0.0
    %541 = vmatprep.subr.mxu0 0.0
    %542 = vmatpush1.msra.mxu0 0.0
    %543 = vmatprep.subr.mxu0 0.0
    %544 = vmatpush1.msra.mxu0 0.0
    %545 = vmatprep.subr.mxu0 0.0
    %546 = vmatpush1.msra.mxu0 0.0
    %547 = vmatprep.subr.mxu0 0.0
    %548 = vmatpush1.msra.mxu0 0.0
    %549 = vmatprep.subr.mxu0 0.0
    %550 = vmatpush1.msra.mxu0 0.0
    %551 = vmatprep.subr.mxu0 0.0
    %552 = vmatpush1.msra.mxu0 0.0
    %553 = vmatprep.subr.mxu0 0.0
    %554 = vmatpush1.msra.mxu0 0.0
    %555 = vmatprep.subr.mxu0 0.0
    %556 = vmatpush1.msra.mxu0 0.0
    %557 = vmatprep.subr.mxu0 0.0
    %558 = vmatpush1.msra.mxu0 0.0
    %559 = vmatprep.subr.mxu0 0.0
    %560 = vmatpush1.msra.mxu0 0.0
    %561 = vmatprep.subr.mxu0 0.0
    %562 = vmatpush1.msra.mxu0 0.0
    %563 = vmatprep.subr.mxu0 0.0
    %564 = vmatpush1.msra.mxu0 0.0
    %565 = vmatprep.subr.mxu0 0.0
    %566 = vmatpush1.msra.mxu0 0.0
    %567 = vmatprep.subr.mxu0 0.0
    %568 = vmatpush1.msra.mxu0 0.0
    %569 = vmatprep.mubr.f32.mxu0 0.0
    %570 = vmatmul.mubr.f32.gmra.mrb[0].mxu0 %v496
    %v571 = vpop.f32.mrb[0].mxu0
    %v572 = vadd.f32 0.0, %v571
    %v573 = vpop.f32.mrb[0].mxu0
    %574 = vmatprep.mubr.f32.mxu0 0.0
    %575 = vmatmul.mubr.f32.gmra.mrb[0].mxu0 %v499
    %v576 = vpop.f32.mrb[0].mxu0
    %v577 = vadd.f32 0.0, %v576
    %v578 = vpop.f32.mrb[0].mxu0
    %579 = vdwg.mxu0
    %vm580 = vcmp.ne.s32.totalorder %v478, 4294967295
    %vm581 = vcmp.ne.s32.totalorder %v479, 4294967295
    %v582 = vsel %vm580, 1, 0
    %v583 = vsel %vm581, 1, 0
    %v584 = vcvt.s32.f32 %v582
    %v585 = vcvt.s32.f32 %v583
    %587 = vset.pattern.permute.xlu0 0
    %588 = vperm.xlu0 %587, %v584
    %v589 = vpop.permute.xlu0 %588
    %592 = vset.pattern.permute.xlu0 0
    %593 = vperm.xlu0 %592, %v585
    %v594 = vpop.permute.xlu0 %593
    %v596 = vmul.f32 %v476, %v589
    %v597 = vmul.f32 %v477, %v594
    %v598 = vadd.f32 %v596, %v572
    %v599 = vadd.f32 %v597, %v577
    %vm600 = vcmask 261120
    %601 = vst.msk [vmem:[#allocation2] sm:$0xff] %vm600, %v598
    %vm602 = vcmask 254976
    %603 = vst.msk [vmem:[#allocation2 + $0x8] sm:$0x3] %vm602, %v599
    // Predicated region
    $region18: #{tpu_custom_call.1} parent=1 // pred_check
      _
    $region19: #{tpu_custom_call.1} parent=1 // pred_check_branch
      %605 = sbr.rel (0) target = $region21
    $region20: #{tpu_custom_call.1} parent=1 // pred_region
      %s607 = ssub.s32 256, 256
      %608 = vsyncadd [#allocation3], %s607
      %s609 = sshll.u32 [#allocation2], 4
      %s610 = int_to_ptr.vmem [resolvable:$true] %s609
      %615 = dma.vmem_to_hbm [thread:$0]  %s610, 256, %s4, [#allocation3], 128, 128, 8
    $region21: #{tpu_custom_call.1} parent=1 // pred_fallthru
      _
    // Predicated region
    $region22: #{tpu_custom_call.1} parent=1 // pred_check
      _
    $region23: #{tpu_custom_call.1} parent=1 // pred_check_branch
      %617 = sbr.rel (0) target = $region25
    $region24: #{tpu_custom_call.1} parent=1 // pred_region
      %618 = dma.done [#allocation3], 256
    $region25: #{tpu_custom_call.1} parent=1 // pred_fallthru
      _
    %619 = vsyncpa [#allocation3], 1

</llo_original>
